<compile_context>
chip_gen: v6e
topology: v6e:2x2x1
jax: 0.10.0
libtpu: 0.0.40
codegen_flags: <defaults>
</compile_context>

<pallas_src>
import functools

import jax
import jax.numpy as jnp
from jax import lax
from jax.experimental import pallas as pl
from jax.experimental.pallas import tpu as pltpu


# ----------------------------- Pallas kernel -------------------------------

def _stencil_slabs(a, Wp, L, sign):
    """Stack the 9 shifted copies of a (rows, L) flattened padded image.

    slab[(p*3+q)*rows + r, m] = a[r, m + sign*((p-1)*Wp + (q-1))], zero-filled
    where the shifted index falls outside [0, L).  Implemented with a single
    lane-dim concat (zero flanks) + 9 static lane slices, i.e. cheap XLU work.
    """
    rows = a.shape[0]
    flank = Wp + 1                      # max |shift| for a 3x3 stencil
    zeros = jnp.zeros((rows, flank), a.dtype)
    wide = jnp.concatenate([zeros, a, zeros], axis=1)      # (rows, L + 2*flank)
    slabs = []
    for p in range(3):
        for q in range(3):
            d = sign * ((p - 1) * Wp + (q - 1))
            slabs.append(wide[:, flank + d: flank + d + L])
    return jnp.concatenate(slabs, axis=0)                  # (9*rows, L)


def _fused_jacobian_kernel(x_ref, wf_ref, wb_ref, b_ref, mask_ref, o_ref, *,
                           Wp, L):
    # x_ref:    (Cin, L)      flattened zero-padded image of this batch element
    # wf_ref:   (Cout, 9*Cin) forward conv weights
    # wb_ref:   (Cin, 9*Cout) transposed conv weights (mean scale folded in)
    # b_ref:    (Cout, 1)     conv bias
    # mask_ref: (1, L)        1 at interior pixels, 0 on the padding ring
    # o_ref:    (Cin, L)      flattened (still padded) gradient

    # ---- forward 3x3 conv as one MXU matmul over stacked shifted slabs ----
    patches = _stencil_slabs(x_ref[...], Wp, L, sign=1)        # (9*Cin, L)
    z = jnp.dot(wf_ref[...], patches,
                preferred_element_type=jnp.float32) + b_ref[...]
    t = jnp.tanh(z)
    # tanh'(z); the 1/(Cout*H*W) mean scale is folded into wb.  The mask zeroes
    # the halo ring so the transposed conv sees a correctly zero-padded g.
    g = (1.0 - t * t) * mask_ref[...]                          # (Cout, L), VMEM only

    # ---- transposed 3x3 conv, also a single MXU matmul ----
    gpat = _stencil_slabs(g, Wp, L, sign=-1)                   # (9*Cout, L)
    grad = jnp.dot(wb_ref[...], gpat,
                   preferred_element_type=jnp.float32)          # (Cin, L)
    o_ref[...] = grad.astype(o_ref.dtype)


# ------------------------------ wrapper -------------------------------------

def jacobin_net_forward(x_nchw, w_oihw, bias, create_graph=True, strict=True):
    """J of f(x) = tanh(conv2d_pad1(x, W) + b).mean([1,2,3]).sum() w.r.t. x.

    create_graph / strict only affect torch autograd bookkeeping, not the
    numerical value (f is scalar, so J == grad_x f).
    """
    del create_graph, strict
    B, Cin, H, W = x_nchw.shape
    Cout = w_oihw.shape[0]
    Hp, Wp = H + 2, W + 2
    L = Hp * Wp
    scale = 1.0 / float(Cout * H * W)
    dtype = x_nchw.dtype

    # Zero-pad spatially by 1 and flatten (Hp, Wp) -> L so that a (dy, dx)
    # stencil offset becomes a single lane shift of dy*Wp + dx in the kernel.
    x_flat = jnp.pad(x_nchw, ((0, 0), (0, 0), (1, 1), (1, 1))).reshape(B, Cin, L)

    # Forward weights: row o, col (p*3+q)*Cin + c  == w[o, c, p, q]
    w_fwd = jnp.transpose(w_oihw, (0, 2, 3, 1)).reshape(Cout, 9 * Cin).astype(dtype)
    # Backward weights: row c, col (p*3+q)*Cout + o == w[o, c, p, q] * scale
    w_bwd = (jnp.transpose(w_oihw, (1, 2, 3, 0)).reshape(Cin, 9 * Cout)
             * scale).astype(dtype)
    b_col = bias.reshape(Cout, 1).astype(dtype)

    ii = jnp.arange(Hp)
    jj = jnp.arange(Wp)
    interior = ((ii >= 1) & (ii <= H))[:, None] & ((jj >= 1) & (jj <= W))[None, :]
    mask = interior.reshape(1, L).astype(dtype)

    kernel = functools.partial(_fused_jacobian_kernel, Wp=Wp, L=L)
    grad_flat = pl.pallas_call(
        kernel,
        out_shape=jax.ShapeDtypeStruct((B, Cin, L), dtype),
        grid_spec=pltpu.PrefetchScalarGridSpec(
            num_scalar_prefetch=0,
            grid=(B,),
            in_specs=[
                pl.BlockSpec((None, Cin, L), lambda b: (b, 0, 0)),   # image slab
                pl.BlockSpec((Cout, 9 * Cin), lambda b: (0, 0)),     # grid-invariant
                pl.BlockSpec((Cin, 9 * Cout), lambda b: (0, 0)),     # grid-invariant
                pl.BlockSpec((Cout, 1), lambda b: (0, 0)),           # bias
                pl.BlockSpec((1, L), lambda b: (0, 0)),              # interior mask
            ],
            out_specs=pl.BlockSpec((None, Cin, L), lambda b: (b, 0, 0)),
        ),
        compiler_params=pltpu.CompilerParams(
            dimension_semantics=("parallel",)),
    )(x_flat, w_fwd, w_bwd, b_col, mask)

    # Crop the padding ring back off (glue only; no extra compute).
    grad = grad_flat.reshape(B, Cin, Hp, Wp)[:, :, 1:-1, 1:-1]
    return grad


# --------------------------- pure-JAX reference ------------------------------

def _dnn_ref(x_nchw, w_oihw, bias):
    z = lax.conv_general_dilated(
        x_nchw, w_oihw, window_strides=(1, 1), padding=((1, 1), (1, 1)),
        dimension_numbers=("NCHW", "OIHW", "NCHW"))
    return jnp.tanh(z + bias[None, :, None, None])


def _f_ref(x, w, b):
    return _dnn_ref(x, w, b).mean(axis=(1, 2, 3)).sum()


# --------------------------------- main --------------------------------------

if __name__ == "__main__":
    key = jax.random.PRNGKey(0)
    kx, kw, kb = jax.random.split(key, 3)

    B, Cin, H, W = 2, 4, 16, 16
    Cout = 4
    x = jax.random.normal(kx, (B, Cin, H, W), jnp.float32)
    w = jax.random.normal(kw, (Cout, Cin, 3, 3), jnp.float32) * 0.1
    b = jax.random.normal(kb, (Cout,), jnp.float32) * 0.1

    J = jax.jit(jacobin_net_forward)(x, w, b)
    J = jax.block_until_ready(J)
    assert J.shape == x.shape and J.dtype == x.dtype

    # Cross-check against JAX autodiff of the same dnn (what torch's
    # autograd.functional.jacobian returns for this scalar f).
    ref = jax.grad(_f_ref)(x, w, b)
    rel_err = jnp.max(jnp.abs(J - ref)) / (jnp.max(jnp.abs(ref)) + 1e-12)
    if not bool(rel_err < 1e-2):
        raise AssertionError(f"mismatch vs autodiff reference: rel_err={rel_err}")

    print("KERNEL_OK")
</pallas_src>

<mosaic_0001>
module attributes {stable_mosaic.version = 11 : i64} {
  func.func @_fused_jacobian_kernel(%arg0: i32, %arg1: memref<1x4x324xf32, #tpu.memory_space<vmem>>, %arg2: memref<4x36xf32, #tpu.memory_space<vmem>>, %arg3: memref<4x36xf32, #tpu.memory_space<vmem>>, %arg4: memref<4x1xf32, #tpu.memory_space<vmem>>, %arg5: memref<1x324xf32, #tpu.memory_space<vmem>>, %arg6: memref<1x4x324xf32, #tpu.memory_space<vmem>>) attributes {dimension_semantics = [#tpu.dimension_semantics<parallel>], iteration_bounds = array<i64: 2>, scalar_prefetch = 0 : i64, scratch_operands = 0 : i64, tpu.core_type = #tpu.core_type<tc>, window_params = [{transform_indices = @transform_0, window_bounds = array<i64: 1, 4, 324>}, {pipeline_mode = #tpu.pipeline_mode<synchronous>, transform_indices = @transform_1, window_bounds = array<i64: 4, 36>}, {pipeline_mode = #tpu.pipeline_mode<synchronous>, transform_indices = @transform_2, window_bounds = array<i64: 4, 36>}, {pipeline_mode = #tpu.pipeline_mode<synchronous>, transform_indices = @transform_3, window_bounds = array<i64: 4, 1>}, {pipeline_mode = #tpu.pipeline_mode<synchronous>, transform_indices = @transform_4, window_bounds = array<i64: 1, 324>}, {transform_indices = @transform_5, window_bounds = array<i64: 1, 4, 324>}]} {
    %c0 = arith.constant 0 : index
    %c0_0 = arith.constant 0 : index
    %c0_1 = arith.constant 0 : index
    %0 = vector.load %arg1[%c0, %c0_0, %c0_1] : memref<1x4x324xf32, #tpu.memory_space<vmem>>, vector<1x4x324xf32>
    %1 = vector.shape_cast %0 : vector<1x4x324xf32> to vector<4x324xf32>
    %cst = arith.constant 0.000000e+00 : f32
    %2 = vector.broadcast %cst : f32 to vector<4x19xf32>
    %3 = tpu.concatenate %2, %1, %2 in 1 : vector<4x19xf32>, vector<4x324xf32>, vector<4x19xf32> -> vector<4x362xf32>
    %4 = vector.extract_strided_slice %3 {offsets = [0, 0], sizes = [4, 324], strides = [1, 1]} : vector<4x362xf32> to vector<4x324xf32>
    %5 = vector.extract_strided_slice %3 {offsets = [0, 1], sizes = [4, 324], strides = [1, 1]} : vector<4x362xf32> to vector<4x324xf32>
    %6 = vector.extract_strided_slice %3 {offsets = [0, 2], sizes = [4, 324], strides = [1, 1]} : vector<4x362xf32> to vector<4x324xf32>
    %7 = vector.extract_strided_slice %3 {offsets = [0, 18], sizes = [4, 324], strides = [1, 1]} : vector<4x362xf32> to vector<4x324xf32>
    %8 = vector.extract_strided_slice %3 {offsets = [0, 19], sizes = [4, 324], strides = [1, 1]} : vector<4x362xf32> to vector<4x324xf32>
    %9 = vector.extract_strided_slice %3 {offsets = [0, 20], sizes = [4, 324], strides = [1, 1]} : vector<4x362xf32> to vector<4x324xf32>
    %10 = vector.extract_strided_slice %3 {offsets = [0, 36], sizes = [4, 324], strides = [1, 1]} : vector<4x362xf32> to vector<4x324xf32>
    %11 = vector.extract_strided_slice %3 {offsets = [0, 37], sizes = [4, 324], strides = [1, 1]} : vector<4x362xf32> to vector<4x324xf32>
    %12 = vector.extract_strided_slice %3 {offsets = [0, 38], sizes = [4, 324], strides = [1, 1]} : vector<4x362xf32> to vector<4x324xf32>
    %13 = tpu.concatenate %4, %5, %6, %7, %8, %9, %10, %11, %12 in 0 : vector<4x324xf32>, vector<4x324xf32>, vector<4x324xf32>, vector<4x324xf32>, vector<4x324xf32>, vector<4x324xf32>, vector<4x324xf32>, vector<4x324xf32>, vector<4x324xf32> -> vector<36x324xf32>
    %c0_2 = arith.constant 0 : index
    %c0_3 = arith.constant 0 : index
    %14 = vector.load %arg2[%c0_2, %c0_3] : memref<4x36xf32, #tpu.memory_space<vmem>>, vector<4x36xf32>
    %cst_4 = arith.constant dense<0.000000e+00> : vector<4x324xf32>
    %15 = tpu.matmul %14, %13, %cst_4 {dimension_numbers = #tpu.dot_dimension_numbers<[1], [0], [0], [1], [0, 0, 1, 1], [], []>} : vector<4x36xf32>, vector<36x324xf32>, vector<4x324xf32> -> vector<4x324xf32>
    %c0_5 = arith.constant 0 : index
    %c0_6 = arith.constant 0 : index
    %16 = vector.load %arg4[%c0_5, %c0_6] : memref<4x1xf32, #tpu.memory_space<vmem>>, vector<4x1xf32>
    %17 = vector.broadcast %16 : vector<4x1xf32> to vector<4x324xf32>
    %18 = arith.addf %15, %17 : vector<4x324xf32>
    %19 = math.tanh %18 : vector<4x324xf32>
    %20 = arith.mulf %19, %19 : vector<4x324xf32>
    %cst_7 = arith.constant 1.000000e+00 : f32
    %21 = vector.broadcast %cst_7 : f32 to vector<4x324xf32>
    %22 = arith.subf %21, %20 : vector<4x324xf32>
    %c0_8 = arith.constant 0 : index
    %c0_9 = arith.constant 0 : index
    %23 = vector.load %arg5[%c0_8, %c0_9] : memref<1x324xf32, #tpu.memory_space<vmem>>, vector<1x324xf32>
    %24 = vector.broadcast %23 : vector<1x324xf32> to vector<4x324xf32>
    %25 = arith.mulf %22, %24 : vector<4x324xf32>
    %cst_10 = arith.constant 0.000000e+00 : f32
    %26 = vector.broadcast %cst_10 : f32 to vector<4x19xf32>
    %27 = tpu.concatenate %26, %25, %26 in 1 : vector<4x19xf32>, vector<4x324xf32>, vector<4x19xf32> -> vector<4x362xf32>
    %28 = vector.extract_strided_slice %27 {offsets = [0, 38], sizes = [4, 324], strides = [1, 1]} : vector<4x362xf32> to vector<4x324xf32>
    %29 = vector.extract_strided_slice %27 {offsets = [0, 37], sizes = [4, 324], strides = [1, 1]} : vector<4x362xf32> to vector<4x324xf32>
    %30 = vector.extract_strided_slice %27 {offsets = [0, 36], sizes = [4, 324], strides = [1, 1]} : vector<4x362xf32> to vector<4x324xf32>
    %31 = vector.extract_strided_slice %27 {offsets = [0, 20], sizes = [4, 324], strides = [1, 1]} : vector<4x362xf32> to vector<4x324xf32>
    %32 = vector.extract_strided_slice %27 {offsets = [0, 19], sizes = [4, 324], strides = [1, 1]} : vector<4x362xf32> to vector<4x324xf32>
    %33 = vector.extract_strided_slice %27 {offsets = [0, 18], sizes = [4, 324], strides = [1, 1]} : vector<4x362xf32> to vector<4x324xf32>
    %34 = vector.extract_strided_slice %27 {offsets = [0, 2], sizes = [4, 324], strides = [1, 1]} : vector<4x362xf32> to vector<4x324xf32>
    %35 = vector.extract_strided_slice %27 {offsets = [0, 1], sizes = [4, 324], strides = [1, 1]} : vector<4x362xf32> to vector<4x324xf32>
    %36 = vector.extract_strided_slice %27 {offsets = [0, 0], sizes = [4, 324], strides = [1, 1]} : vector<4x362xf32> to vector<4x324xf32>
    %37 = tpu.concatenate %28, %29, %30, %31, %32, %33, %34, %35, %36 in 0 : vector<4x324xf32>, vector<4x324xf32>, vector<4x324xf32>, vector<4x324xf32>, vector<4x324xf32>, vector<4x324xf32>, vector<4x324xf32>, vector<4x324xf32>, vector<4x324xf32> -> vector<36x324xf32>
    %c0_11 = arith.constant 0 : index
    %c0_12 = arith.constant 0 : index
    %38 = vector.load %arg3[%c0_11, %c0_12] : memref<4x36xf32, #tpu.memory_space<vmem>>, vector<4x36xf32>
    %cst_13 = arith.constant dense<0.000000e+00> : vector<4x324xf32>
    %39 = tpu.matmul %38, %37, %cst_13 {dimension_numbers = #tpu.dot_dimension_numbers<[1], [0], [0], [1], [0, 0, 1, 1], [], []>} : vector<4x36xf32>, vector<36x324xf32>, vector<4x324xf32> -> vector<4x324xf32>
    %c0_14 = arith.constant 0 : index
    %c0_15 = arith.constant 0 : index
    %c0_16 = arith.constant 0 : index
    %40 = vector.load %arg6[%c0_14, %c0_15, %c0_16] : memref<1x4x324xf32, #tpu.memory_space<vmem>>, vector<1x4x324xf32>
    %41 = vector.shape_cast %40 : vector<1x4x324xf32> to vector<4x324xf32>
    %42 = vector.shape_cast %39 : vector<4x324xf32> to vector<1x4x324xf32>
    tpu.vector_store %arg6[%c0_14, %c0_15, %c0_16], %42 {strides = array<i32>} : memref<1x4x324xf32, #tpu.memory_space<vmem>>, vector<1x4x324xf32>,
    return
  }
  func.func @transform_0(%arg0: i32) -> (i32, i32, i32) {
    %c0_i32 = arith.constant 0 : i32
    %c0_i32_0 = arith.constant 0 : i32
    %c0_i32_1 = arith.constant 0 : i32
    return %arg0, %c0_i32, %c0_i32_0 : i32, i32, i32
  }
  func.func @transform_1(%arg0: i32) -> (i32, i32) {
    %c0_i32 = arith.constant 0 : i32
    %c0_i32_0 = arith.constant 0 : i32
    %c0_i32_1 = arith.constant 0 : i32
    return %c0_i32, %c0_i32_0 : i32, i32
  }
  func.func @transform_2(%arg0: i32) -> (i32, i32) {
    %c0_i32 = arith.constant 0 : i32
    %c0_i32_0 = arith.constant 0 : i32
    %c0_i32_1 = arith.constant 0 : i32
    return %c0_i32, %c0_i32_0 : i32, i32
  }
  func.func @transform_3(%arg0: i32) -> (i32, i32) {
    %c0_i32 = arith.constant 0 : i32
    %c0_i32_0 = arith.constant 0 : i32
    %c0_i32_1 = arith.constant 0 : i32
    return %c0_i32, %c0_i32_0 : i32, i32
  }
  func.func @transform_4(%arg0: i32) -> (i32, i32) {
    %c0_i32 = arith.constant 0 : i32
    %c0_i32_0 = arith.constant 0 : i32
    %c0_i32_1 = arith.constant 0 : i32
    return %c0_i32, %c0_i32_0 : i32, i32
  }
  func.func @transform_5(%arg0: i32) -> (i32, i32, i32) {
    %c0_i32 = arith.constant 0 : i32
    %c0_i32_0 = arith.constant 0 : i32
    %c0_i32_1 = arith.constant 0 : i32
    return %arg0, %c0_i32, %c0_i32_0 : i32, i32, i32
  }
}

</mosaic_0001>

<llo_original>
// kernel: jacobin_net_forward.1
$region0: #{jacobin_net_forward.1}
  #allocation0 [shape = 'u32[]', space=smem, size = 0x4, offset = 0x4, fixed_abs, tag = 'smem constant byte address 0x4 - core index']
  #allocation1 [shape = 'u32[144,128]{1,0:T(1,128)}', space=vmem, size = 0x12000, scoped, tag = 'internal scratch']
  %s0 = inlined_call_operand.vmem [shape: f32[2,4,324], index: 0, kind: input, shape index: {}]
  %s1 = inlined_call_operand.vmem [shape: f32[4,36], index: 1, kind: input, shape index: {}]
  %s2 = inlined_call_operand.vmem [shape: f32[4,36], index: 2, kind: input, shape index: {}]
  %s3 = inlined_call_operand.vmem [shape: f32[4,1], index: 3, kind: input, shape index: {}]
  %s4 = inlined_call_operand.vmem [shape: f32[1,324], index: 4, kind: input, shape index: {}]
  %s5 = inlined_call_operand.vmem [shape: f32[2,4,324], index: 5, kind: output, shape index: {}]
  %s6 = sld [smem:[#allocation0]]
  $region53: #{jacobin_net_forward.1} parent=0
    _
  %s8 = ssub.s32 1, %s6
  %s9 = scalar_select 0, %s8, %s6
  loop: start=0, step=1, limit=4
  $region2: #{jacobin_net_forward.1} parent=0 // loop_pre_header
    _
  $region3: #{jacobin_net_forward.1} parent=0 // loop_header
    %s11 = sphi 0, %s15
    %p12 = scmp.ge.s32.totalorder %s11, 4
    %s21 = sphi 0, %s23
    %s24 = sphi 0, %s21
    %s25 = sphi 0, %s24
    %s41 = sphi 0, %s25
    %s45 = sphi 0, %s45
    %s47 = sphi 0, %s45
    %s48 = sphi 0, %s47
    %s62 = sphi 0, %s48
    %s66 = sphi 0, %s66
    %s68 = sphi 0, %s66
    %s69 = sphi 0, %s68
    %s83 = sphi 0, %s69
    %s87 = sphi 0, %s87
    %s89 = sphi 0, %s87
    %s90 = sphi 0, %s89
    %s104 = sphi 0, %s90
    %s108 = sphi 0, %s108
    %s110 = sphi 0, %s108
    %s111 = sphi 0, %s110
    %s125 = sphi 0, %s111
    %s131 = sphi 0, %s133
    %s134 = sphi 0, %s131
    %s135 = sphi 0, %s134
    %s151 = sphi 0, %s135
  $region4: #{jacobin_net_forward.1} parent=0 // loop_header_branch
    %14 = sbr.rel (%p12) target = $region8
  $region5: #{jacobin_net_forward.1} parent=0 // loop_body
    %s16 = ssub.s32 %s11, 1
    %s17 = ssub.s32 %s11, 2
    %s18 = sadd.s32 %s11, 1
    %s19 = ssub.s32 %s11, %s18
    %p20 = scmp.eq.s32.totalorder %s19, 0
    %s22 = sadd.s32 %s21, 1
    %s23 = scalar_select %p20, %s21, %s22
    %p26 = pneg %p20
    %p27 = scmp.eq.s32.totalorder %s11, 1
    %p28 = por %p26, %p27
    %p29 = scmp.ne.s32.totalorder %s21, %s24
    %p30 = scmp.eq.s32.totalorder %s11, 0
    %p31 = por %p29, %p30
    %p32 = scmp.ne.s32.totalorder %s21, %s24
    %p33 = scmp.eq.s32.totalorder %s16, 1
    %p34 = por %p32, %p33
    %p35 = scmp.ne.s32.totalorder %s24, %s25
    %p36 = scmp.eq.s32.totalorder %s16, 0
    %p37 = por %p35, %p36
    %p38 = scmp.ne.s32.totalorder %s24, %s25
    %p39 = scmp.eq.s32.totalorder %s17, 1
    %p40 = por %p38, %p39
    %p42 = scmp.ne.s32.totalorder %s25, %s41
    %p43 = scmp.eq.s32.totalorder %s17, 0
    %p44 = por %p42, %p43
    %s46 = sadd.s32 %s45, 1
    %p49 = scmp.eq.s32.totalorder %s11, 1
    %p50 = scmp.ne.s32.totalorder %s45, %s47
    %p51 = scmp.eq.s32.totalorder %s11, 0
    %p52 = por %p50, %p51
    %p53 = scmp.ne.s32.totalorder %s45, %s47
    %p54 = scmp.eq.s32.totalorder %s16, 1
    %p55 = por %p53, %p54
    %p56 = scmp.ne.s32.totalorder %s47, %s48
    %p57 = scmp.eq.s32.totalorder %s16, 0
    %p58 = por %p56, %p57
    %p59 = scmp.ne.s32.totalorder %s47, %s48
    %p60 = scmp.eq.s32.totalorder %s17, 1
    %p61 = por %p59, %p60
    %p63 = scmp.ne.s32.totalorder %s48, %s62
    %p64 = scmp.eq.s32.totalorder %s17, 0
    %p65 = por %p63, %p64
    %s67 = sadd.s32 %s66, 1
    %p70 = scmp.eq.s32.totalorder %s11, 1
    %p71 = scmp.ne.s32.totalorder %s66, %s68
    %p72 = scmp.eq.s32.totalorder %s11, 0
    %p73 = por %p71, %p72
    %p74 = scmp.ne.s32.totalorder %s66, %s68
    %p75 = scmp.eq.s32.totalorder %s16, 1
    %p76 = por %p74, %p75
    %p77 = scmp.ne.s32.totalorder %s68, %s69
    %p78 = scmp.eq.s32.totalorder %s16, 0
    %p79 = por %p77, %p78
    %p80 = scmp.ne.s32.totalorder %s68, %s69
    %p81 = scmp.eq.s32.totalorder %s17, 1
    %p82 = por %p80, %p81
    %p84 = scmp.ne.s32.totalorder %s69, %s83
    %p85 = scmp.eq.s32.totalorder %s17, 0
    %p86 = por %p84, %p85
    %s88 = sadd.s32 %s87, 1
    %p91 = scmp.eq.s32.totalorder %s11, 1
    %p92 = scmp.ne.s32.totalorder %s87, %s89
    %p93 = scmp.eq.s32.totalorder %s11, 0
    %p94 = por %p92, %p93
    %p95 = scmp.ne.s32.totalorder %s87, %s89
    %p96 = scmp.eq.s32.totalorder %s16, 1
    %p97 = por %p95, %p96
    %p98 = scmp.ne.s32.totalorder %s89, %s90
    %p99 = scmp.eq.s32.totalorder %s16, 0
    %p100 = por %p98, %p99
    %p101 = scmp.ne.s32.totalorder %s89, %s90
    %p102 = scmp.eq.s32.totalorder %s17, 1
    %p103 = por %p101, %p102
    %p105 = scmp.ne.s32.totalorder %s90, %s104
    %p106 = scmp.eq.s32.totalorder %s17, 0
    %p107 = por %p105, %p106
    %s109 = sadd.s32 %s108, 1
    %p112 = scmp.eq.s32.totalorder %s11, 1
    %p113 = scmp.ne.s32.totalorder %s108, %s110
    %p114 = scmp.eq.s32.totalorder %s11, 0
    %p115 = por %p113, %p114
    %p116 = scmp.ne.s32.totalorder %s108, %s110
    %p117 = scmp.eq.s32.totalorder %s16, 1
    %p118 = por %p116, %p117
    %p119 = scmp.ne.s32.totalorder %s110, %s111
    %p120 = scmp.eq.s32.totalorder %s16, 0
    %p121 = por %p119, %p120
    %p122 = scmp.ne.s32.totalorder %s110, %s111
    %p123 = scmp.eq.s32.totalorder %s17, 1
    %p124 = por %p122, %p123
    %p126 = scmp.ne.s32.totalorder %s111, %s125
    %p127 = scmp.eq.s32.totalorder %s17, 0
    %p128 = por %p126, %p127
    %s129 = ssub.s32 %s11, %s18
    %p130 = scmp.eq.s32.totalorder %s129, 0
    %s132 = sadd.s32 %s131, 1
    %s133 = scalar_select %p130, %s131, %s132
    %p136 = pneg %p130
    %p137 = scmp.eq.s32.totalorder %s11, 1
    %p138 = por %p136, %p137
    %p139 = scmp.ne.s32.totalorder %s131, %s134
    %p140 = scmp.eq.s32.totalorder %s11, 0
    %p141 = por %p139, %p140
    %p142 = scmp.ne.s32.totalorder %s131, %s134
    %p143 = scmp.eq.s32.totalorder %s16, 1
    %p144 = por %p142, %p143
    %p145 = scmp.ne.s32.totalorder %s134, %s135
    %p146 = scmp.eq.s32.totalorder %s16, 0
    %p147 = por %p145, %p146
    %p148 = scmp.ne.s32.totalorder %s134, %s135
    %p149 = scmp.eq.s32.totalorder %s17, 1
    %p150 = por %p148, %p149
    %p152 = scmp.ne.s32.totalorder %s135, %s151
    %p153 = scmp.eq.s32.totalorder %s17, 0
    %p154 = por %p152, %p153
    %p155 = scmp.le.s32.totalorder 1, %s11
    %p156 = scmp.lt.s32.totalorder %s11, 3
    %p157 = pnand %p155, %p156
    %p158 = pneg %p157
    // Predicated region
    $region9: #{jacobin_net_forward.1} parent=5 // pred_check
      _
    $region10: #{jacobin_net_forward.1} parent=5 // pred_check_branch
      %160 = sbr.rel (%p157) target = $region12
    $region11: #{jacobin_net_forward.1} parent=5 // pred_region
      %s161 = ssub.s32 %s11, 1
      // Predicated region
      $region13: #{jacobin_net_forward.1} parent=11 // pred_check
        %p162 = pneg %p58
      $region14: #{jacobin_net_forward.1} parent=11 // pred_check_branch
        %164 = sbr.rel (%p162) target = $region16
      $region15: #{jacobin_net_forward.1} parent=11 // pred_region
        _
      $region16: #{jacobin_net_forward.1} parent=11 // pred_fallthru
        _
      // Predicated region
      $region17: #{jacobin_net_forward.1} parent=11 // pred_check
        %p165 = pneg %p79
      $region18: #{jacobin_net_forward.1} parent=11 // pred_check_branch
        %167 = sbr.rel (%p165) target = $region20
      $region19: #{jacobin_net_forward.1} parent=11 // pred_region
        _
      $region20: #{jacobin_net_forward.1} parent=11 // pred_fallthru
        _
      // Predicated region
      $region21: #{jacobin_net_forward.1} parent=11 // pred_check
        %p168 = pneg %p100
      $region22: #{jacobin_net_forward.1} parent=11 // pred_check_branch
        %170 = sbr.rel (%p168) target = $region24
      $region23: #{jacobin_net_forward.1} parent=11 // pred_region
        _
      $region24: #{jacobin_net_forward.1} parent=11 // pred_fallthru
        _
      // Predicated region
      $region25: #{jacobin_net_forward.1} parent=11 // pred_check
        %p171 = pneg %p121
      $region26: #{jacobin_net_forward.1} parent=11 // pred_check_branch
        %173 = sbr.rel (%p171) target = $region28
      $region27: #{jacobin_net_forward.1} parent=11 // pred_region
        _
      $region28: #{jacobin_net_forward.1} parent=11 // pred_fallthru
        _
    $region12: #{jacobin_net_forward.1} parent=5 // pred_fallthru
      _
    %p174 = scmp.lt.s32.totalorder %s11, 2
    // Predicated region
    $region29: #{jacobin_net_forward.1} parent=5 // pred_check
      %p175 = pneg %p174
    $region30: #{jacobin_net_forward.1} parent=5 // pred_check_branch
      %177 = sbr.rel (%p175) target = $region32
    $region31: #{jacobin_net_forward.1} parent=5 // pred_region
      // Predicated region
      $region33: #{jacobin_net_forward.1} parent=31 // pred_check
        %p178 = pneg %p31
      $region34: #{jacobin_net_forward.1} parent=31 // pred_check_branch
        %180 = sbr.rel (%p178) target = $region36
      $region35: #{jacobin_net_forward.1} parent=31 // pred_region
        %p181 = scmp.lt.s32.totalorder %s11, 1
        %s182 = scalar_select %p181, %s11, 1
        %s183 = smul.addr %s182, 3
        %s184 = smul.addr %s183, 4
        %s185 = scalar_lea.vmem %s0, %s184
      $region36: #{jacobin_net_forward.1} parent=31 // pred_fallthru
        _
    $region32: #{jacobin_net_forward.1} parent=5 // pred_fallthru
      _
    %p186 = scmp.le.s32.totalorder 1, %s11
    %p187 = scmp.lt.s32.totalorder %s11, 3
    %p188 = pnand %p186, %p187
    %p189 = pneg %p188
    // Predicated region
    $region37: #{jacobin_net_forward.1} parent=5 // pred_check
      _
    $region38: #{jacobin_net_forward.1} parent=5 // pred_check_branch
      %191 = sbr.rel (%p188) target = $region40
    $region39: #{jacobin_net_forward.1} parent=5 // pred_region
      %s192 = ssub.s32 %s11, 1
      %p193 = scmp.lt.s32.totalorder %s16, 1
      %s194 = scalar_select %p193, %s16, 1
      %s195 = smul.addr %s194, 3
      %s196 = smul.addr %s195, 4
      %s197 = scalar_lea.vmem %s0, %s196
      %p198 = pneg %p37
      %p199 = pneg %p34
      %p200 = pneg %p58
      %p201 = pneg %p55
      %p202 = pneg %p79
      %p203 = pneg %p76
      %p204 = pneg %p100
      %p205 = pneg %p97
      %p206 = pneg %p121
      %p207 = pneg %p118
      %p208 = pneg %p147
      %p209 = pneg %p144
      %p210 = scmp.lt.s32.totalorder %s16, 1
      %s211 = scalar_select %p210, %s16, 1
      %s212 = smul.addr %s211, 3
      %s213 = smul.addr %s212, 4
      %s214 = scalar_lea.vmem %s5, %s213
      %p215 = scmp.lt.s32.totalorder %s16, 1
      %s216 = scalar_select %p215, %s16, 1
      %s217 = smul.addr %s216, 3
      %s218 = smul.addr %s217, 4
      %s219 = scalar_lea.vmem %s0, %s218
      %p220 = scmp.lt.s32.totalorder %s16, 1
      %s221 = scalar_select %p220, %s16, 1
      %s222 = smul.addr %s221, 3
      %s223 = smul.addr %s222, 4
      %s224 = scalar_lea.vmem %s5, %s223
      %v225 = vld [vmem:[%s219] sm:$0xff]
      %v226 = vld [vmem:[%s219 + $0x8] sm:$0xf]
      %v229 = vcombine.high %v225, %v225
      %230 = vrot.lane.b32.xlu0 %v225, 19
      %v231 = vpop.permute.xlu0 %230
      %232 = vrot.lane.b32.xlu0 %v229, 19
      %v233 = vpop.permute.xlu0 %232
      %234 = vrot.lane.b32.xlu0 %v226, 19
      %v235 = vpop.permute.xlu0 %234
      %vm236 = vcmask 154624
      %v237 = vsel %vm236, %v231, %v233
      %v238 = vsel %vm236, %v233, %v235
      %v242 = vsel %vm236, 0.0, %v231
      %vm243 = vcmask 711680
      %v244 = vsel %vm243, %v238, 0.0
      %v247 = vrot.slane %v242, 4
      %v248 = vrot.slane %v237, 4
      %v249 = vrot.slane %v244, 4
      %250 = vrot.lane.b32.xlu0 %v247, 127
      %v251 = vpop.permute.xlu0 %250
      %252 = vrot.lane.b32.xlu0 %v248, 127
      %v253 = vpop.permute.xlu0 %252
      %254 = vrot.lane.b32.xlu0 %v249, 127
      %v255 = vpop.permute.xlu0 %254
      %vm256 = vcmask 1039360
      %v257 = vsel %vm256, %v251, %v253
      %v258 = vsel %vm256, %v253, %v255
      %262 = vrot.lane.b32.xlu0 %v242, 126
      %v263 = vpop.permute.xlu0 %262
      %264 = vrot.lane.b32.xlu0 %v237, 126
      %v265 = vpop.permute.xlu0 %264
      %266 = vrot.lane.b32.xlu0 %v244, 126
      %v267 = vpop.permute.xlu0 %266
      %vm268 = vcmask 1031168
      %v269 = vsel %vm268, %v263, %v265
      %v270 = vsel %vm268, %v265, %v267
      %274 = vrot.lane.b32.xlu0 %v247, 110
      %v275 = vpop.permute.xlu0 %274
      %276 = vrot.lane.b32.xlu0 %v248, 110
      %v277 = vpop.permute.xlu0 %276
      %278 = vrot.lane.b32.xlu0 %v249, 110
      %v279 = vpop.permute.xlu0 %278
      %vm280 = vcmask 900096
      %v281 = vsel %vm280, %v275, %v277
      %v282 = vsel %vm280, %v277, %v279
      %286 = vrot.lane.b32.xlu0 %v242, 109
      %v287 = vpop.permute.xlu0 %286
      %288 = vrot.lane.b32.xlu0 %v237, 109
      %v289 = vpop.permute.xlu0 %288
      %290 = vrot.lane.b32.xlu0 %v244, 109
      %v291 = vpop.permute.xlu0 %290
      %vm292 = vcmask 891904
      %v293 = vsel %vm292, %v287, %v289
      %v294 = vsel %vm292, %v289, %v291
      %298 = vrot.lane.b32.xlu0 %v247, 108
      %v299 = vpop.permute.xlu0 %298
      %300 = vrot.lane.b32.xlu0 %v248, 108
      %v301 = vpop.permute.xlu0 %300
      %302 = vrot.lane.b32.xlu0 %v249, 108
      %v303 = vpop.permute.xlu0 %302
      %vm304 = vcmask 883712
      %v305 = vsel %vm304, %v299, %v301
      %v306 = vsel %vm304, %v301, %v303
      %310 = vrot.lane.b32.xlu0 %v242, 92
      %v311 = vpop.permute.xlu0 %310
      %312 = vrot.lane.b32.xlu0 %v237, 92
      %v313 = vpop.permute.xlu0 %312
      %314 = vrot.lane.b32.xlu0 %v244, 92
      %v315 = vpop.permute.xlu0 %314
      %vm316 = vcmask 752640
      %v317 = vsel %vm316, %v311, %v313
      %v318 = vsel %vm316, %v313, %v315
      %322 = vrot.lane.b32.xlu0 %v247, 91
      %v323 = vpop.permute.xlu0 %322
      %324 = vrot.lane.b32.xlu0 %v248, 91
      %v325 = vpop.permute.xlu0 %324
      %326 = vrot.lane.b32.xlu0 %v249, 91
      %v327 = vpop.permute.xlu0 %326
      %vm328 = vcmask 744448
      %v329 = vsel %vm328, %v323, %v325
      %v330 = vsel %vm328, %v325, %v327
      %334 = vrot.lane.b32.xlu0 %v242, 90
      %v335 = vpop.permute.xlu0 %334
      %336 = vrot.lane.b32.xlu0 %v237, 90
      %v337 = vpop.permute.xlu0 %336
      %338 = vrot.lane.b32.xlu0 %v244, 90
      %v339 = vpop.permute.xlu0 %338
      %vm340 = vcmask 736256
      %v341 = vsel %vm340, %v335, %v337
      %v342 = vsel %vm340, %v337, %v339
      %vm343 = vcmask 1043456
      %v344 = vsel %vm343, %v242, %v257
      %v345 = vsel %vm343, %v237, %v258
      %v346 = vsel %vm343, %v244, %v255
      %v347 = vsel %vm343, %v269, %v281
      %v348 = vsel %vm343, %v270, %v282
      %v349 = vsel %vm343, %v267, %v279
      %v350 = vsel %vm343, %v293, %v305
      %v351 = vsel %vm343, %v294, %v306
      %v352 = vsel %vm343, %v291, %v303
      %v353 = vsel %vm343, %v317, %v329
      %v354 = vsel %vm343, %v318, %v330
      %v355 = vsel %vm343, %v315, %v327
      %v356 = vld [vmem:[%s1] sm:$0xf]
      %v357 = vld [vmem:[%s3] sm:$0xf]
      %359 = vset.pattern.permute.xlu0 0
      %360 = vperm.xlu0 %359, %v357
      %v361 = vpop.permute.xlu0 %360
      %vm363 = vcmask 293888
      %v365 = vsel %vm363, %v356, 0
      %v367 = vsel %vm343, %v341, 0
      %v369 = vsel %vm343, %v342, 0
      %v371 = vsel %vm343, %v339, 0
      %373 = vmatprep.subr.mxu0 0.0
      %374 = vmatpush1.msra.mxu0 0.0
      %375 = vmatprep.subr.mxu0 0.0
      %376 = vmatpush1.msra.mxu0 0.0
      %377 = vmatprep.subr.mxu0 0.0
      %378 = vmatpush1.msra.mxu0 0.0
      %379 = vmatprep.subr.mxu0 0.0
      %380 = vmatpush1.msra.mxu0 0.0
      %381 = vmatprep.subr.mxu0 0.0
      %382 = vmatpush1.msra.mxu0 0.0
      %383 = vmatprep.subr.mxu0 0.0
      %384 = vmatpush1.msra.mxu0 0.0
      %385 = vmatprep.subr.mxu0 0.0
      %386 = vmatpush1.msra.mxu0 0.0
      %387 = vmatprep.subr.mxu0 0.0
      %388 = vmatpush1.msra.mxu0 0.0
      %389 = vmatprep.subr.mxu0 0.0
      %390 = vmatpush1.msra.mxu0 0.0
      %391 = vmatprep.subr.mxu0 0.0
      %392 = vmatpush1.msra.mxu0 0.0
      %393 = vmatprep.subr.mxu0 0.0
      %394 = vmatpush1.msra.mxu0 0.0
      %395 = vmatprep.subr.mxu0 %v369
      %396 = vmatpush1.msra.mxu0 %v367
      %397 = vmatprep.subr.mxu0 %v354
      %398 = vmatpush1.msra.mxu0 %v353
      %399 = vmatprep.subr.mxu0 %v351
      %400 = vmatpush1.msra.mxu0 %v350
      %401 = vmatprep.subr.mxu0 %v348
      %402 = vmatpush1.msra.mxu0 %v347
      %403 = vmatprep.subr.mxu0 %v345
      %404 = vmatpush1.msra.mxu0 %v344
      %405 = vmatprep.subr.mxu0 0.0
      %406 = vmatpush2.msra.mxu0 0.0
      %407 = vmatprep.subr.mxu0 0.0
      %408 = vmatpush2.msra.mxu0 0.0
      %409 = vmatprep.subr.mxu0 0.0
      %410 = vmatpush2.msra.mxu0 0.0
      %411 = vmatprep.subr.mxu0 0.0
      %412 = vmatpush2.msra.mxu0 0.0
      %413 = vmatprep.subr.mxu0 0.0
      %414 = vmatpush2.msra.mxu0 0.0
      %415 = vmatprep.subr.mxu0 0.0
      %416 = vmatpush2.msra.mxu0 0.0
      %417 = vmatprep.subr.mxu0 0.0
      %418 = vmatpush2.msra.mxu0 0.0
      %419 = vmatprep.subr.mxu0 0.0
      %420 = vmatpush2.msra.mxu0 0.0
      %421 = vmatprep.subr.mxu0 0.0
      %422 = vmatpush2.msra.mxu0 0.0
      %423 = vmatprep.subr.mxu0 0.0
      %424 = vmatpush2.msra.mxu0 0.0
      %425 = vmatprep.subr.mxu0 0.0
      %426 = vmatpush2.msra.mxu0 0.0
      %427 = vmatprep.subr.mxu0 0.0
      %428 = vmatpush2.msra.mxu0 0.0
      %429 = vmatprep.subr.mxu0 0.0
      %430 = vmatpush2.msra.mxu0 0.0
      %431 = vmatprep.subr.mxu0 0.0
      %432 = vmatpush2.msra.mxu0 0.0
      %433 = vmatprep.subr.mxu0 0.0
      %434 = vmatpush2.msra.mxu0 0.0
      %435 = vmatprep.subr.mxu0 0.0
      %436 = vmatpush2.msra.mxu0 0.0
      %437 = vmatprep.mubr.f32.mxu0 0.0
      %438 = vmatmul.mubr.f32.gmra.mxu0 %v365
      %v439 = vpop.f32.mrf.mxu0
      %v440 = vadd.f32 %v361, %v439
      %v441 = vpop.f32.mrf.mxu0
      %v442 = vadd.f32 %v361, %v441
      %443 = vdwg.mxu0
      %444 = vmatprep.subr.mxu0 0.0
      %445 = vmatpush1.msra.mxu0 0.0
      %446 = vmatprep.subr.mxu0 0.0
      %447 = vmatpush1.msra.mxu0 0.0
      %448 = vmatprep.subr.mxu0 0.0
      %449 = vmatpush1.msra.mxu0 0.0
      %450 = vmatprep.subr.mxu0 0.0
      %451 = vmatpush1.msra.mxu0 0.0
      %452 = vmatprep.subr.mxu0 0.0
      %453 = vmatpush1.msra.mxu0 0.0
      %454 = vmatprep.subr.mxu0 0.0
      %455 = vmatpush1.msra.mxu0 0.0
      %456 = vmatprep.subr.mxu0 0.0
      %457 = vmatpush1.msra.mxu0 0.0
      %458 = vmatprep.subr.mxu0 0.0
      %459 = vmatpush1.msra.mxu0 0.0
      %460 = vmatprep.subr.mxu0 0.0
      %461 = vmatpush1.msra.mxu0 0.0
      %462 = vmatprep.subr.mxu0 0.0
      %463 = vmatpush1.msra.mxu0 0.0
      %464 = vmatprep.subr.mxu0 0.0
      %465 = vmatpush1.msra.mxu0 0.0
      %466 = vmatprep.subr.mxu0 0.0
      %467 = vmatpush1.msra.mxu0 %v371
      %468 = vmatprep.subr.mxu0 0.0
      %469 = vmatpush1.msra.mxu0 %v355
      %470 = vmatprep.subr.mxu0 0.0
      %471 = vmatpush1.msra.mxu0 %v352
      %472 = vmatprep.subr.mxu0 0.0
      %473 = vmatpush1.msra.mxu0 %v349
      %474 = vmatprep.subr.mxu0 0.0
      %475 = vmatpush1.msra.mxu0 %v346
      %476 = vmatprep.subr.mxu0 0.0
      %477 = vmatpush2.msra.mxu0 0.0
      %478 = vmatprep.subr.mxu0 0.0
      %479 = vmatpush2.msra.mxu0 0.0
      %480 = vmatprep.subr.mxu0 0.0
      %481 = vmatpush2.msra.mxu0 0.0
      %482 = vmatprep.subr.mxu0 0.0
      %483 = vmatpush2.msra.mxu0 0.0
      %484 = vmatprep.subr.mxu0 0.0
      %485 = vmatpush2.msra.mxu0 0.0
      %486 = vmatprep.subr.mxu0 0.0
      %487 = vmatpush2.msra.mxu0 0.0
      %488 = vmatprep.subr.mxu0 0.0
      %489 = vmatpush2.msra.mxu0 0.0
      %490 = vmatprep.subr.mxu0 0.0
      %491 = vmatpush2.msra.mxu0 0.0
      %492 = vmatprep.subr.mxu0 0.0
      %493 = vmatpush2.msra.mxu0 0.0
      %494 = vmatprep.subr.mxu0 0.0
      %495 = vmatpush2.msra.mxu0 0.0
      %496 = vmatprep.subr.mxu0 0.0
      %497 = vmatpush2.msra.mxu0 0.0
      %498 = vmatprep.subr.mxu0 0.0
      %499 = vmatpush2.msra.mxu0 0.0
      %500 = vmatprep.subr.mxu0 0.0
      %501 = vmatpush2.msra.mxu0 0.0
      %502 = vmatprep.subr.mxu0 0.0
      %503 = vmatpush2.msra.mxu0 0.0
      %504 = vmatprep.subr.mxu0 0.0
      %505 = vmatpush2.msra.mxu0 0.0
      %506 = vmatprep.subr.mxu0 0.0
      %507 = vmatpush2.msra.mxu0 0.0
      %508 = vmatprep.mubr.f32.mxu0 0.0
      %509 = vmatmul.mubr.f32.gmra.mxu0 %v365
      %v510 = vpop.f32.mrf.mxu0
      %v511 = vadd.f32 %v361, %v510
      %v512 = vpop.f32.mrf.mxu0
      %513 = vdwg.mxu0
      %v514 = vtanh.pop %v440
      %v515 = vtanh.pop %v442
      %v516 = vtanh.pop %v511
      %v517 = vmul.f32 %v514, %v514
      %v518 = vmul.f32 %v515, %v515
      %v519 = vmul.f32 %v516, %v516
      %v520 = vsub.f32 1.0, %v517
      %v521 = vsub.f32 1.0, %v518
      %v522 = vsub.f32 1.0, %v519
      %v523 = vld [vmem:[%s4] sm:$0x7]
      %v525 = vlaneseq
      %v526 = vshrl.u32 %v525, 7
      %v527 = vsub.s32 0, %v526
      %v528 = vrot.slane %v523, %v527
      %v529 = vlaneseq
      %v530 = vshrl.u32 %v529, 7
      %v531 = vsub.s32 1, %v530
      %v532 = vrot.slane %v523, %v531
      %v533 = vlaneseq
      %v534 = vshrl.u32 %v533, 7
      %v535 = vsub.s32 2, %v534
      %v536 = vrot.slane %v523, %v535
      %v540 = vmul.f32 %v520, %v528
      %v541 = vmul.f32 %v521, %v532
      %v542 = vmul.f32 %v522, %v536
      %546 = vrot.lane.b32.xlu0 %v540, 19
      %v547 = vpop.permute.xlu0 %546
      %548 = vrot.lane.b32.xlu0 %v541, 19
      %v549 = vpop.permute.xlu0 %548
      %550 = vrot.lane.b32.xlu0 %v542, 19
      %v551 = vpop.permute.xlu0 %550
      %v552 = vsel %vm236, %v547, %v549
      %v553 = vsel %vm236, %v549, %v551
      %v557 = vsel %vm236, 0.0, %v547
      %v558 = vsel %vm243, %v553, 0.0
      %v561 = vrot.slane %v557, 4
      %v562 = vrot.slane %v552, 4
      %v563 = vrot.slane %v558, 4
      %564 = vrot.lane.b32.xlu0 %v561, 1
      %v565 = vpop.permute.xlu0 %564
      %566 = vrot.lane.b32.xlu0 %v562, 1
      %v567 = vpop.permute.xlu0 %566
      %568 = vrot.lane.b32.xlu0 %v563, 1
      %v569 = vpop.permute.xlu0 %568
      %vm570 = vcmask 7168
      %v571 = vsel %vm570, %v565, %v567
      %v572 = vsel %vm570, %v567, %v569
      %576 = vrot.lane.b32.xlu0 %v557, 2
      %v577 = vpop.permute.xlu0 %576
      %578 = vrot.lane.b32.xlu0 %v552, 2
      %v579 = vpop.permute.xlu0 %578
      %580 = vrot.lane.b32.xlu0 %v558, 2
      %v581 = vpop.permute.xlu0 %580
      %vm582 = vcmask 15360
      %v583 = vsel %vm582, %v577, %v579
      %v584 = vsel %vm582, %v579, %v581
      %588 = vrot.lane.b32.xlu0 %v561, 18
      %v589 = vpop.permute.xlu0 %588
      %590 = vrot.lane.b32.xlu0 %v562, 18
      %v591 = vpop.permute.xlu0 %590
      %592 = vrot.lane.b32.xlu0 %v563, 18
      %v593 = vpop.permute.xlu0 %592
      %vm594 = vcmask 146432
      %v595 = vsel %vm594, %v589, %v591
      %v596 = vsel %vm594, %v591, %v593
      %600 = vrot.lane.b32.xlu0 %v557, 19
      %v601 = vpop.permute.xlu0 %600
      %602 = vrot.lane.b32.xlu0 %v552, 19
      %v603 = vpop.permute.xlu0 %602
      %604 = vrot.lane.b32.xlu0 %v558, 19
      %v605 = vpop.permute.xlu0 %604
      %v606 = vsel %vm236, %v601, %v603
      %v607 = vsel %vm236, %v603, %v605
      %611 = vrot.lane.b32.xlu0 %v561, 20
      %v612 = vpop.permute.xlu0 %611
      %613 = vrot.lane.b32.xlu0 %v562, 20
      %v614 = vpop.permute.xlu0 %613
      %615 = vrot.lane.b32.xlu0 %v563, 20
      %v616 = vpop.permute.xlu0 %615
      %vm617 = vcmask 162816
      %v618 = vsel %vm617, %v612, %v614
      %v619 = vsel %vm617, %v614, %v616
      %623 = vrot.lane.b32.xlu0 %v557, 36
      %v624 = vpop.permute.xlu0 %623
      %625 = vrot.lane.b32.xlu0 %v552, 36
      %v626 = vpop.permute.xlu0 %625
      %627 = vrot.lane.b32.xlu0 %v558, 36
      %v628 = vpop.permute.xlu0 %627
      %v629 = vsel %vm363, %v624, %v626
      %v630 = vsel %vm363, %v626, %v628
      %634 = vrot.lane.b32.xlu0 %v561, 37
      %v635 = vpop.permute.xlu0 %634
      %636 = vrot.lane.b32.xlu0 %v562, 37
      %v637 = vpop.permute.xlu0 %636
      %638 = vrot.lane.b32.xlu0 %v563, 37
      %v639 = vpop.permute.xlu0 %638
      %vm640 = vcmask 302080
      %v641 = vsel %vm640, %v635, %v637
      %v642 = vsel %vm640, %v637, %v639
      %646 = vrot.lane.b32.xlu0 %v557, 38
      %v647 = vpop.permute.xlu0 %646
      %648 = vrot.lane.b32.xlu0 %v552, 38
      %v649 = vpop.permute.xlu0 %648
      %650 = vrot.lane.b32.xlu0 %v558, 38
      %v651 = vpop.permute.xlu0 %650
      %vm652 = vcmask 310272
      %v653 = vsel %vm652, %v647, %v649
      %v654 = vsel %vm652, %v649, %v651
      %v655 = vsel %vm343, %v557, %v565
      %v656 = vsel %vm343, %v552, %v571
      %v657 = vsel %vm343, %v558, %v572
      %v658 = vsel %vm343, %v577, %v589
      %v659 = vsel %vm343, %v583, %v595
      %v660 = vsel %vm343, %v584, %v596
      %v661 = vsel %vm343, %v601, %v612
      %v662 = vsel %vm343, %v606, %v618
      %v663 = vsel %vm343, %v607, %v619
      %v664 = vsel %vm343, %v624, %v635
      %v665 = vsel %vm343, %v629, %v641
      %v666 = vsel %vm343, %v630, %v642
      %v667 = vld [vmem:[%s2] sm:$0xf]
      %680 = vrot.lane.b32.xlu0 %v655, 90
      %v681 = vpop.permute.xlu0 %680
      %682 = vrot.lane.b32.xlu0 %v656, 90
      %v683 = vpop.permute.xlu0 %682
      %684 = vrot.lane.b32.xlu0 %v657, 90
      %v685 = vpop.permute.xlu0 %684
      %686 = vrot.lane.b32.xlu0 %v658, 90
      %v687 = vpop.permute.xlu0 %686
      %688 = vrot.lane.b32.xlu0 %v659, 90
      %v689 = vpop.permute.xlu0 %688
      %690 = vrot.lane.b32.xlu0 %v660, 90
      %v691 = vpop.permute.xlu0 %690
      %692 = vrot.lane.b32.xlu0 %v661, 90
      %v693 = vpop.permute.xlu0 %692
      %694 = vrot.lane.b32.xlu0 %v662, 90
      %v695 = vpop.permute.xlu0 %694
      %696 = vrot.lane.b32.xlu0 %v663, 90
      %v697 = vpop.permute.xlu0 %696
      %698 = vrot.lane.b32.xlu0 %v664, 90
      %v699 = vpop.permute.xlu0 %698
      %700 = vrot.lane.b32.xlu0 %v665, 90
      %v701 = vpop.permute.xlu0 %700
      %702 = vrot.lane.b32.xlu0 %v666, 90
      %v703 = vpop.permute.xlu0 %702
      %704 = vrot.lane.b32.xlu0 %v647, 90
      %v705 = vpop.permute.xlu0 %704
      %706 = vrot.lane.b32.xlu0 %v653, 90
      %v707 = vpop.permute.xlu0 %706
      %708 = vrot.lane.b32.xlu0 %v654, 90
      %v709 = vpop.permute.xlu0 %708
      %v710 = vsel %vm340, %v681, %v683
      %v711 = vsel %vm340, %v683, %v685
      %v712 = vsel %vm340, %v687, %v689
      %v713 = vsel %vm340, %v689, %v691
      %v714 = vsel %vm340, %v693, %v695
      %v715 = vsel %vm340, %v695, %v697
      %v716 = vsel %vm340, %v699, %v701
      %v717 = vsel %vm340, %v701, %v703
      %v718 = vsel %vm340, %v705, %v707
      %v719 = vsel %vm340, %v707, %v709
      %v733 = vsel %vm363, %v667, 0
      %v735 = vsel %vm343, %v718, 0
      %v737 = vsel %vm343, %v719, 0
      %v739 = vsel %vm343, %v709, 0
      %741 = vmatprep.subr.mxu0 0.0
      %742 = vmatpush1.msra.mxu0 0.0
      %743 = vmatprep.subr.mxu0 0.0
      %744 = vmatpush1.msra.mxu0 0.0
      %745 = vmatprep.subr.mxu0 0.0
      %746 = vmatpush1.msra.mxu0 0.0
      %747 = vmatprep.subr.mxu0 0.0
      %748 = vmatpush1.msra.mxu0 0.0
      %749 = vmatprep.subr.mxu0 0.0
      %750 = vmatpush1.msra.mxu0 0.0
      %751 = vmatprep.subr.mxu0 0.0
      %752 = vmatpush1.msra.mxu0 0.0
      %753 = vmatprep.subr.mxu0 0.0
      %754 = vmatpush1.msra.mxu0 0.0
      %755 = vmatprep.subr.mxu0 0.0
      %756 = vmatpush1.msra.mxu0 0.0
      %757 = vmatprep.subr.mxu0 0.0
      %758 = vmatpush1.msra.mxu0 0.0
      %759 = vmatprep.subr.mxu0 0.0
      %760 = vmatpush1.msra.mxu0 0.0
      %761 = vmatprep.subr.mxu0 0.0
      %762 = vmatpush1.msra.mxu0 0.0
      %763 = vmatprep.subr.mxu0 %v737
      %764 = vmatpush1.msra.mxu0 %v735
      %765 = vmatprep.subr.mxu0 %v717
      %766 = vmatpush1.msra.mxu0 %v716
      %767 = vmatprep.subr.mxu0 %v715
      %768 = vmatpush1.msra.mxu0 %v714
      %769 = vmatprep.subr.mxu0 %v713
      %770 = vmatpush1.msra.mxu0 %v712
      %771 = vmatprep.subr.mxu0 %v711
      %772 = vmatpush1.msra.mxu0 %v710
      %773 = vmatprep.subr.mxu0 0.0
      %774 = vmatpush2.msra.mxu0 0.0
      %775 = vmatprep.subr.mxu0 0.0
      %776 = vmatpush2.msra.mxu0 0.0
      %777 = vmatprep.subr.mxu0 0.0
      %778 = vmatpush2.msra.mxu0 0.0
      %779 = vmatprep.subr.mxu0 0.0
      %780 = vmatpush2.msra.mxu0 0.0
      %781 = vmatprep.subr.mxu0 0.0
      %782 = vmatpush2.msra.mxu0 0.0
      %783 = vmatprep.subr.mxu0 0.0
      %784 = vmatpush2.msra.mxu0 0.0
      %785 = vmatprep.subr.mxu0 0.0
      %786 = vmatpush2.msra.mxu0 0.0
      %787 = vmatprep.subr.mxu0 0.0
      %788 = vmatpush2.msra.mxu0 0.0
      %789 = vmatprep.subr.mxu0 0.0
      %790 = vmatpush2.msra.mxu0 0.0
      %791 = vmatprep.subr.mxu0 0.0
      %792 = vmatpush2.msra.mxu0 0.0
      %793 = vmatprep.subr.mxu0 0.0
      %794 = vmatpush2.msra.mxu0 0.0
      %795 = vmatprep.subr.mxu0 0.0
      %796 = vmatpush2.msra.mxu0 0.0
      %797 = vmatprep.subr.mxu0 0.0
      %798 = vmatpush2.msra.mxu0 0.0
      %799 = vmatprep.subr.mxu0 0.0
      %800 = vmatpush2.msra.mxu0 0.0
      %801 = vmatprep.subr.mxu0 0.0
      %802 = vmatpush2.msra.mxu0 0.0
      %803 = vmatprep.subr.mxu0 0.0
      %804 = vmatpush2.msra.mxu0 0.0
      %805 = vmatprep.mubr.f32.mxu0 0.0
      %806 = vmatmul.mubr.f32.gmra.mxu0 %v733
      %v807 = vpop.f32.mrf.mxu0
      %v808 = vadd.f32 0.0, %v807
      %v809 = vpop.f32.mrf.mxu0
      %v810 = vadd.f32 0.0, %v809
      %811 = vdwg.mxu0
      %812 = vmatprep.subr.mxu0 0.0
      %813 = vmatpush1.msra.mxu0 0.0
      %814 = vmatprep.subr.mxu0 0.0
      %815 = vmatpush1.msra.mxu0 0.0
      %816 = vmatprep.subr.mxu0 0.0
      %817 = vmatpush1.msra.mxu0 0.0
      %818 = vmatprep.subr.mxu0 0.0
      %819 = vmatpush1.msra.mxu0 0.0
      %820 = vmatprep.subr.mxu0 0.0
      %821 = vmatpush1.msra.mxu0 0.0
      %822 = vmatprep.subr.mxu0 0.0
      %823 = vmatpush1.msra.mxu0 0.0
      %824 = vmatprep.subr.mxu0 0.0
      %825 = vmatpush1.msra.mxu0 0.0
      %826 = vmatprep.subr.mxu0 0.0
      %827 = vmatpush1.msra.mxu0 0.0
      %828 = vmatprep.subr.mxu0 0.0
      %829 = vmatpush1.msra.mxu0 0.0
      %830 = vmatprep.subr.mxu0 0.0
      %831 = vmatpush1.msra.mxu0 0.0
      %832 = vmatprep.subr.mxu0 0.0
      %833 = vmatpush1.msra.mxu0 0.0
      %834 = vmatprep.subr.mxu0 0.0
      %835 = vmatpush1.msra.mxu0 %v739
      %836 = vmatprep.subr.mxu0 0.0
      %837 = vmatpush1.msra.mxu0 %v703
      %838 = vmatprep.subr.mxu0 0.0
      %839 = vmatpush1.msra.mxu0 %v697
      %840 = vmatprep.subr.mxu0 0.0
      %841 = vmatpush1.msra.mxu0 %v691
      %842 = vmatprep.subr.mxu0 0.0
      %843 = vmatpush1.msra.mxu0 %v685
      %844 = vmatprep.subr.mxu0 0.0
      %845 = vmatpush2.msra.mxu0 0.0
      %846 = vmatprep.subr.mxu0 0.0
      %847 = vmatpush2.msra.mxu0 0.0
      %848 = vmatprep.subr.mxu0 0.0
      %849 = vmatpush2.msra.mxu0 0.0
      %850 = vmatprep.subr.mxu0 0.0
      %851 = vmatpush2.msra.mxu0 0.0
      %852 = vmatprep.subr.mxu0 0.0
      %853 = vmatpush2.msra.mxu0 0.0
      %854 = vmatprep.subr.mxu0 0.0
      %855 = vmatpush2.msra.mxu0 0.0
      %856 = vmatprep.subr.mxu0 0.0
      %857 = vmatpush2.msra.mxu0 0.0
      %858 = vmatprep.subr.mxu0 0.0
      %859 = vmatpush2.msra.mxu0 0.0
      %860 = vmatprep.subr.mxu0 0.0
      %861 = vmatpush2.msra.mxu0 0.0
      %862 = vmatprep.subr.mxu0 0.0
      %863 = vmatpush2.msra.mxu0 0.0
      %864 = vmatprep.subr.mxu0 0.0
      %865 = vmatpush2.msra.mxu0 0.0
      %866 = vmatprep.subr.mxu0 0.0
      %867 = vmatpush2.msra.mxu0 0.0
      %868 = vmatprep.subr.mxu0 0.0
      %869 = vmatpush2.msra.mxu0 0.0
      %870 = vmatprep.subr.mxu0 0.0
      %871 = vmatpush2.msra.mxu0 0.0
      %872 = vmatprep.subr.mxu0 0.0
      %873 = vmatpush2.msra.mxu0 0.0
      %874 = vmatprep.subr.mxu0 0.0
      %875 = vmatpush2.msra.mxu0 0.0
      %876 = vmatprep.mubr.f32.mxu0 0.0
      %877 = vmatmul.mubr.f32.gmra.mxu0 %v733
      %v878 = vpop.f32.mrf.mxu0
      %v879 = vadd.f32 0.0, %v878
      %v880 = vpop.f32.mrf.mxu0
      %881 = vdwg.mxu0
      %v884 = vcombine.low %v808, %v810
      %886 = vst [vmem:[%s224] sm:$0xff] %v884
      %vm887 = vcmask 551936
      %888 = vst.msk [vmem:[%s224 + $0x8] sm:$0xf] %vm887, %v879
      %p889 = scmp.lt.s32.totalorder %s16, 1
      %s890 = scalar_select %p889, %s16, 1
      %s891 = smul.addr %s890, 3
      %s892 = smul.addr %s891, 4
      %s893 = scalar_lea.vmem %s5, %s892
      // Predicated region
      $region41: #{jacobin_net_forward.1} parent=39 // pred_check
        %p894 = pneg %p144
      $region42: #{jacobin_net_forward.1} parent=39 // pred_check_branch
        %896 = sbr.rel (%p894) target = $region44
      $region43: #{jacobin_net_forward.1} parent=39 // pred_region
        _
      $region44: #{jacobin_net_forward.1} parent=39 // pred_fallthru
        _
    $region40: #{jacobin_net_forward.1} parent=5 // pred_fallthru
      _
    %p897 = scmp.le.s32.totalorder 2, %s11
    // Predicated region
    $region45: #{jacobin_net_forward.1} parent=5 // pred_check
      %p898 = pneg %p897
    $region46: #{jacobin_net_forward.1} parent=5 // pred_check_branch
      %900 = sbr.rel (%p898) target = $region48
    $region47: #{jacobin_net_forward.1} parent=5 // pred_region
      %s901 = ssub.s32 %s11, 2
      // Predicated region
      $region49: #{jacobin_net_forward.1} parent=47 // pred_check
        %p902 = pneg %p150
      $region50: #{jacobin_net_forward.1} parent=47 // pred_check_branch
        %904 = sbr.rel (%p902) target = $region52
      $region51: #{jacobin_net_forward.1} parent=47 // pred_region
        %p905 = scmp.lt.s32.totalorder %s17, 1
        %s906 = scalar_select %p905, %s17, 1
        %s907 = smul.addr %s906, 3
        %s908 = smul.addr %s907, 4
        %s909 = scalar_lea.vmem %s5, %s908
      $region52: #{jacobin_net_forward.1} parent=47 // pred_fallthru
        _
    $region48: #{jacobin_net_forward.1} parent=5 // pred_fallthru
      _
  $region6: #{jacobin_net_forward.1} parent=0 // loop_footer
    %s15 = sadd.s32 1, %s11
  $region7: #{jacobin_net_forward.1} parent=0 // loop_footer_branch
    %10 = sbr.rel target = $region3
  $region8: #{jacobin_net_forward.1} parent=0 // loop_exit
    _

</llo_original>
